<compile_context>
chip_gen: v7x
topology: tpu7x:2x2x1
jax: 0.10.0
libtpu: 0.0.40
codegen_flags: <defaults>
</compile_context>

<pallas_src>
import functools

import jax
import jax.numpy as jnp
from jax.experimental import pallas as pl
from jax.experimental.pallas import tpu as pltpu


def _round_up(x, m):
    return (x + m - 1) // m * m


def _conv_stats_kernel(p_ref, w_ref, conv_ref, stats_ref):
    # p_ref: (TILE_M, Kp) bf16, w_ref: (Kp, Coutp) bf16
    # conv_ref: (TILE_M, Coutp) f32, stats_ref: (1, 2, Coutp) f32 per-tile partials
    acc = jnp.dot(p_ref[...], w_ref[...], preferred_element_type=jnp.float32)
    conv_ref[...] = acc
    s = jnp.sum(acc, axis=0, keepdims=True)                   # (1, Coutp)
    ss = jnp.sum(acc * acc, axis=0, keepdims=True)            # (1, Coutp)
    stats_ref[...] = jnp.concatenate([s, ss], axis=0)[None]   # (1, 2, Coutp)


def _bn_act_kernel(conv_ref, scale_ref, shift_ref, o_ref, *, with_relu):
    y = conv_ref[...] * scale_ref[...] + shift_ref[...]
    if with_relu:
        y = jnp.maximum(y, 0.0)
    o_ref[...] = y.astype(o_ref.dtype)


def conv_block(x_nchw, w_oihw, bias, gamma, beta, *,
               padding=1, stride=1, eps=1e-5, with_nonlinearity=True,
               tile_m=1024):
    # Conv bias is cancelled exactly by training-mode BatchNorm mean subtraction,
    # so it is not fed to the kernel (numerically identical output, one less DMA).
    del bias

    N, Cin, H, W = x_nchw.shape
    Cout, Cin_w, KH, KW = w_oihw.shape
    assert Cin == Cin_w
    Ho = (H + 2 * padding - KH) // stride + 1
    Wo = (W + 2 * padding - KW) // stride + 1
    M = N * Ho * Wo
    K = KH * KW * Cin

    # Lane-dense channel padding and sublane-aligned M tiling.
    Coutp = _round_up(Cout, 128)
    Kp = _round_up(K, 128)
    tile_m = _round_up(min(tile_m, M), 8)
    Mp = _round_up(M, tile_m)
    num_tiles = Mp // tile_m

    # ---- glue: layout + im2col (pure data movement) ----
    # TODO(synk): move im2col into the kernel (halo'd NHWC row tiles + 9 shifted
    # jnp.dot accumulations) to cut patch-matrix HBM traffic ~9x.
    x_nhwc = jnp.transpose(x_nchw, (0, 2, 3, 1))
    x_pad = jnp.pad(x_nhwc, ((0, 0), (padding, padding), (padding, padding), (0, 0)))
    taps = []
    for kh in range(KH):
        for kw in range(KW):
            taps.append(x_pad[:, kh:kh + stride * Ho:stride, kw:kw + stride * Wo:stride, :])
    patches = jnp.concatenate(taps, axis=-1).reshape(M, K)

    # bf16 MXU inputs (f32 accumulation in-kernel); zero padding is exact
    # (padded rows/cols contribute nothing to the matmul or the BN statistics).
    patches = jnp.pad(patches.astype(jnp.bfloat16), ((0, Mp - M), (0, Kp - K)))
    w_mat = jnp.transpose(w_oihw, (2, 3, 1, 0)).reshape(K, Cout)
    w_mat = jnp.pad(w_mat.astype(jnp.bfloat16), ((0, Kp - K), (0, Coutp - Cout)))

    # Explicit scoped-VMEM limit: safe on v5e/v6e/v7x and far above what the
    # double-buffered (tile_m, Kp)/(tile_m, Coutp) blocks need.
    vmem_limit = 32 * 1024 * 1024

    # ---- pass 1: conv on the MXU + per-tile BN partial statistics ----
    conv_out, partial_stats = pl.pallas_call(
        _conv_stats_kernel,
        grid=(num_tiles,),
        in_specs=[
            pl.BlockSpec((tile_m, Kp), lambda i: (i, 0)),
            pl.BlockSpec((Kp, Coutp), lambda i: (0, 0)),
        ],
        out_specs=[
            pl.BlockSpec((tile_m, Coutp), lambda i: (i, 0)),
            pl.BlockSpec((1, 2, Coutp), lambda i: (i, 0, 0)),
        ],
        out_shape=[
            jax.ShapeDtypeStruct((Mp, Coutp), jnp.float32),
            jax.ShapeDtypeStruct((num_tiles, 2, Coutp), jnp.float32),
        ],
        compiler_params=pltpu.CompilerParams(
            dimension_semantics=("parallel",),
            vmem_limit_bytes=vmem_limit,
        ),
    )(patches, w_mat)

    # ---- BN statistics over all real rows (padded rows contribute exact zeros) ----
    stats = jnp.sum(partial_stats, axis=0)                    # (2, Coutp)
    count = jnp.float32(M)
    mean = stats[0] / count
    var = jnp.maximum(stats[1] / count - mean * mean, 0.0)
    rstd = jax.lax.rsqrt(var + eps)
    gamma_p = jnp.pad(gamma.astype(jnp.float32), (0, Coutp - Cout))
    beta_p = jnp.pad(beta.astype(jnp.float32), (0, Coutp - Cout))
    scale = (gamma_p * rstd).reshape(1, Coutp)
    shift = (beta_p - mean * gamma_p * rstd).reshape(1, Coutp)

    # ---- pass 2: normalize + affine + ReLU (mem-bound, fully parallel) ----
    out2d = pl.pallas_call(
        functools.partial(_bn_act_kernel, with_relu=with_nonlinearity),
        grid=(num_tiles,),
        in_specs=[
            pl.BlockSpec((tile_m, Coutp), lambda i: (i, 0)),
            pl.BlockSpec((1, Coutp), lambda i: (0, 0)),
            pl.BlockSpec((1, Coutp), lambda i: (0, 0)),
        ],
        out_specs=pl.BlockSpec((tile_m, Coutp), lambda i: (i, 0)),
        out_shape=jax.ShapeDtypeStruct((Mp, Coutp), x_nchw.dtype),
        compiler_params=pltpu.CompilerParams(
            dimension_semantics=("parallel",),
            vmem_limit_bytes=vmem_limit,
        ),
    )(conv_out, scale, shift)

    out = out2d[:M, :Cout].reshape(N, Ho, Wo, Cout)
    return jnp.transpose(out, (0, 3, 1, 2))                   # back to NCHW


def _reference(x, w, b, gamma, beta, eps=1e-5, with_relu=True,
               cast_inputs_to_bf16=False):
    if cast_inputs_to_bf16:
        x = x.astype(jnp.bfloat16).astype(jnp.float32)
        w = w.astype(jnp.bfloat16).astype(jnp.float32)
    y = jax.lax.conv_general_dilated(
        x, w, window_strides=(1, 1), padding=((1, 1), (1, 1)),
        dimension_numbers=("NCHW", "OIHW", "NCHW"),
        precision=jax.lax.Precision.HIGHEST)
    y = y + b.reshape(1, -1, 1, 1)
    mean = jnp.mean(y, axis=(0, 2, 3), keepdims=True)
    var = jnp.mean(jnp.square(y - mean), axis=(0, 2, 3), keepdims=True)
    y = (y - mean) * jax.lax.rsqrt(var + eps)
    y = y * gamma.reshape(1, -1, 1, 1) + beta.reshape(1, -1, 1, 1)
    return jnp.maximum(y, 0.0) if with_relu else y


if __name__ == "__main__":
    key = jax.random.PRNGKey(0)
    kx, kw, kb = jax.random.split(key, 3)

    N, Cin, H, W = 2, 4, 16, 16
    Cout, KH, KW = 8, 3, 3

    x = jax.random.normal(kx, (N, Cin, H, W), dtype=jnp.float32)
    # deterministic synthetic parameters (PyTorch Conv2d/BatchNorm2d shapes)
    w = 0.1 * jax.random.normal(kw, (Cout, Cin, KH, KW), dtype=jnp.float32)
    b = 0.1 * jax.random.normal(kb, (Cout,), dtype=jnp.float32)
    gamma = jnp.ones((Cout,), dtype=jnp.float32)   # BN weight init
    beta = jnp.zeros((Cout,), dtype=jnp.float32)   # BN bias init

    # small tile so the demo exercises a multi-tile grid (M = 2*16*16 = 512 -> 4 tiles)
    out = conv_block(x, w, b, gamma, beta, with_nonlinearity=True, tile_m=128)
    out = jax.block_until_ready(out)
    assert out.shape == (N, Cout, H, W), out.shape

    # Tight check vs a reference seeing the same bf16-rounded conv inputs
    # (validates conv / cross-tile BN / ReLU logic).
    ref_bf16 = _reference(x, w, b, gamma, beta, cast_inputs_to_bf16=True)
    err = float(jnp.max(jnp.abs(out - ref_bf16)))
    assert jnp.allclose(out, ref_bf16, atol=2e-3, rtol=2e-3), err

    # Looser sanity check vs the pure-f32 reference (bf16 MXU inputs, f32 accumulate).
    ref_f32 = _reference(x, w, b, gamma, beta, cast_inputs_to_bf16=False)
    err32 = float(jnp.max(jnp.abs(out - ref_f32)))
    assert jnp.allclose(out, ref_f32, atol=5e-2, rtol=5e-2), err32

    print("KERNEL_OK")
</pallas_src>

<mosaic_0001>
module attributes {stable_mosaic.version = 11 : i64} {
  func.func @_conv_stats_kernel(%arg0: i32, %arg1: memref<128x128xbf16, #tpu.memory_space<vmem>>, %arg2: memref<128x128xbf16, #tpu.memory_space<vmem>>, %arg3: memref<128x128xf32, #tpu.memory_space<vmem>>, %arg4: memref<1x2x128xf32, #tpu.memory_space<vmem>>) attributes {dimension_semantics = [#tpu.dimension_semantics<parallel>], iteration_bounds = array<i64: 4>, scalar_prefetch = 0 : i64, scratch_operands = 0 : i64, tpu.core_type = #tpu.core_type<tc>, window_params = [{transform_indices = @transform_0, window_bounds = array<i64: 128, 128>}, {pipeline_mode = #tpu.pipeline_mode<synchronous>, transform_indices = @transform_1, window_bounds = array<i64: 128, 128>}, {transform_indices = @transform_2, window_bounds = array<i64: 128, 128>}, {transform_indices = @transform_3, window_bounds = array<i64: 1, 2, 128>}]} {
    %c0 = arith.constant 0 : index
    %c0_0 = arith.constant 0 : index
    %0 = vector.load %arg1[%c0, %c0_0] : memref<128x128xbf16, #tpu.memory_space<vmem>>, vector<128x128xbf16>
    %c0_1 = arith.constant 0 : index
    %c0_2 = arith.constant 0 : index
    %1 = vector.load %arg2[%c0_1, %c0_2] : memref<128x128xbf16, #tpu.memory_space<vmem>>, vector<128x128xbf16>
    %cst = arith.constant dense<0.000000e+00> : vector<128x128xf32>
    %2 = tpu.matmul %0, %1, %cst {dimension_numbers = #tpu.dot_dimension_numbers<[1], [0], [0], [1], [0, 0, 1, 1], [], []>} : vector<128x128xbf16>, vector<128x128xbf16>, vector<128x128xf32> -> vector<128x128xf32>
    %c0_3 = arith.constant 0 : index
    %c0_4 = arith.constant 0 : index
    %3 = vector.load %arg3[%c0_3, %c0_4] : memref<128x128xf32, #tpu.memory_space<vmem>>, vector<128x128xf32>
    tpu.vector_store %arg3[%c0_3, %c0_4], %2 {strides = array<i32>} : memref<128x128xf32, #tpu.memory_space<vmem>>, vector<128x128xf32>,
    %cst_5 = arith.constant dense<0.000000e+00> : vector<128xf32>
    %4 = vector.multi_reduction <add>, %2, %cst_5 [0] : vector<128x128xf32> to vector<128xf32>
    %5 = vector.shape_cast %4 : vector<128xf32> to vector<1x128xf32>
    %6 = arith.mulf %2, %2 : vector<128x128xf32>
    %cst_6 = arith.constant dense<0.000000e+00> : vector<128xf32>
    %7 = vector.multi_reduction <add>, %6, %cst_6 [0] : vector<128x128xf32> to vector<128xf32>
    %8 = vector.shape_cast %7 : vector<128xf32> to vector<1x128xf32>
    %9 = tpu.concatenate %5, %8 in 0 : vector<1x128xf32>, vector<1x128xf32> -> vector<2x128xf32>
    %10 = vector.shape_cast %9 : vector<2x128xf32> to vector<1x2x128xf32>
    %c0_7 = arith.constant 0 : index
    %c0_8 = arith.constant 0 : index
    %c0_9 = arith.constant 0 : index
    %11 = vector.load %arg4[%c0_7, %c0_8, %c0_9] : memref<1x2x128xf32, #tpu.memory_space<vmem>>, vector<1x2x128xf32>
    tpu.vector_store %arg4[%c0_7, %c0_8, %c0_9], %10 {strides = array<i32>} : memref<1x2x128xf32, #tpu.memory_space<vmem>>, vector<1x2x128xf32>,
    return
  }
  func.func @transform_0(%arg0: i32) -> (i32, i32) {
    %c0_i32 = arith.constant 0 : i32
    %c0_i32_0 = arith.constant 0 : i32
    return %arg0, %c0_i32 : i32, i32
  }
  func.func @transform_1(%arg0: i32) -> (i32, i32) {
    %c0_i32 = arith.constant 0 : i32
    %c0_i32_0 = arith.constant 0 : i32
    %c0_i32_1 = arith.constant 0 : i32
    return %c0_i32, %c0_i32_0 : i32, i32
  }
  func.func @transform_2(%arg0: i32) -> (i32, i32) {
    %c0_i32 = arith.constant 0 : i32
    %c0_i32_0 = arith.constant 0 : i32
    return %arg0, %c0_i32 : i32, i32
  }
  func.func @transform_3(%arg0: i32) -> (i32, i32, i32) {
    %c0_i32 = arith.constant 0 : i32
    %c0_i32_0 = arith.constant 0 : i32
    %c0_i32_1 = arith.constant 0 : i32
    return %arg0, %c0_i32, %c0_i32_0 : i32, i32, i32
  }
}

</mosaic_0001>

<llo_original>
// kernel: tpu_custom_call.1
$region0: #{tpu_custom_call.1}
  #allocation0 [shape = 'u32[]', space=smem, size = 0x4, offset = 0x4, fixed_abs, tag = 'smem constant byte address 0x4 - core index']
  #allocation1 [shape = 'u32[144,128]{1,0:T(1,128)}', space=vmem, size = 0x12000, scoped, tag = 'internal scratch']
  %s0 = inlined_call_operand.hbm [shape: bf16[512,128], index: 0, kind: input, shape index: {}]
  %s1 = inlined_call_operand.hbm [shape: bf16[128,128], index: 1, kind: input, shape index: {}]
  %s2 = inlined_call_operand.hbm [shape: f32[512,128], index: 2, kind: output, shape index: {0}]
  %s3 = inlined_call_operand.hbm [shape: f32[4,2,128], index: 3, kind: output, shape index: {1}]
  %4 = xla_tuple %s2, %s3
  %s5 = sld [smem:[#allocation0]]
  $region57: #{tpu_custom_call.1} parent=0
    _
  %s7 = ssub.s32 1, %s5
  %s8 = scalar_select 0, %s7, %s5
  $region1: #{tpu_custom_call.1} parent=0
    #allocation2 [shape = 'u8[65536]{0}', space=vmem, size = 0x10000, scoped, tag = 'input window, operand 0']
    #allocation3 [shape = 's32[2]{0}', space=sflag, size = 0x8, scoped, tag = 'scoped memory for tpu_custom_call.1']
    #allocation4 [shape = 's32[2]{0}', space=sflag, size = 0x8, scoped, tag = 'scoped memory for tpu_custom_call.1']
    #allocation5 [shape = 'u8[32768]{0}', space=vmem, size = 0x8000, scoped, tag = 'input window, operand 1, single buffered']
    #allocation6 [shape = 's32[1]{0}', space=sflag, size = 0x4, scoped, tag = 'scoped memory for tpu_custom_call.1']
    #allocation7 [shape = 'u8[131072]{0}', space=vmem, size = 0x20000, scoped, tag = 'output window, operand 0']
    #allocation8 [shape = 'u8[2048]{0}', space=vmem, size = 0x800, scoped, tag = 'output window, operand 1']
    #allocation9 [shape = 's32[2]{0}', space=sflag, size = 0x8, scoped, tag = 'scoped memory for tpu_custom_call.1']
    %9 = vsyncpa [#allocation3], 0
    %s10 = scalar_lea.sflag [#allocation3], 1
    %11 = vsyncpa %s10, 0
    %12 = vsyncpa [#allocation6], 0
    %13 = vsyncpa [#allocation4], 0
    %s14 = scalar_lea.sflag [#allocation4], 1
    %15 = vsyncpa %s14, 0
    %16 = vsyncpa [#allocation9], 0
    %s17 = scalar_lea.sflag [#allocation9], 1
    %18 = vsyncpa %s17, 0
    loop: start=0, step=1, limit=6
    $region2: #{tpu_custom_call.1} parent=1 // loop_pre_header
      _
    $region3: #{tpu_custom_call.1} parent=1 // loop_header
      %s20 = sphi 0, %s24
      %p21 = scmp.ge.s32.totalorder %s20, 6
      %s30 = sphi 0, %s32
      %s33 = sphi 0, %s30
      %s34 = sphi 0, %s33
      %s50 = sphi 0, %s34
      %s54 = sphi 0, %s54
      %s56 = sphi 0, %s54
      %s57 = sphi 0, %s56
      %s71 = sphi 0, %s57
      %s77 = sphi 0, %s79
      %s80 = sphi 0, %s77
      %s81 = sphi 0, %s80
      %s97 = sphi 0, %s81
      %s103 = sphi 0, %s105
      %s106 = sphi 0, %s103
      %s107 = sphi 0, %s106
      %s123 = sphi 0, %s107
    $region4: #{tpu_custom_call.1} parent=1 // loop_header_branch
      %23 = sbr.rel (%p21) target = $region8
    $region5: #{tpu_custom_call.1} parent=1 // loop_body
      %s25 = ssub.s32 %s20, 1
      %s26 = ssub.s32 %s20, 2
      %s27 = sadd.s32 %s20, 1
      %s28 = ssub.s32 %s20, %s27
      %p29 = scmp.eq.s32.totalorder %s28, 0
      %s31 = sadd.s32 %s30, 1
      %s32 = scalar_select %p29, %s30, %s31
      %p35 = pneg %p29
      %p36 = scmp.eq.s32.totalorder %s20, 3
      %p37 = por %p35, %p36
      %p38 = scmp.ne.s32.totalorder %s30, %s33
      %p39 = scmp.eq.s32.totalorder %s20, 0
      %p40 = por %p38, %p39
      %p41 = scmp.ne.s32.totalorder %s30, %s33
      %p42 = scmp.eq.s32.totalorder %s25, 3
      %p43 = por %p41, %p42
      %p44 = scmp.ne.s32.totalorder %s33, %s34
      %p45 = scmp.eq.s32.totalorder %s25, 0
      %p46 = por %p44, %p45
      %p47 = scmp.ne.s32.totalorder %s33, %s34
      %p48 = scmp.eq.s32.totalorder %s26, 3
      %p49 = por %p47, %p48
      %p51 = scmp.ne.s32.totalorder %s34, %s50
      %p52 = scmp.eq.s32.totalorder %s26, 0
      %p53 = por %p51, %p52
      %s55 = sadd.s32 %s54, 1
      %p58 = scmp.eq.s32.totalorder %s20, 3
      %p59 = scmp.ne.s32.totalorder %s54, %s56
      %p60 = scmp.eq.s32.totalorder %s20, 0
      %p61 = por %p59, %p60
      %p62 = scmp.ne.s32.totalorder %s54, %s56
      %p63 = scmp.eq.s32.totalorder %s25, 3
      %p64 = por %p62, %p63
      %p65 = scmp.ne.s32.totalorder %s56, %s57
      %p66 = scmp.eq.s32.totalorder %s25, 0
      %p67 = por %p65, %p66
      %p68 = scmp.ne.s32.totalorder %s56, %s57
      %p69 = scmp.eq.s32.totalorder %s26, 3
      %p70 = por %p68, %p69
      %p72 = scmp.ne.s32.totalorder %s57, %s71
      %p73 = scmp.eq.s32.totalorder %s26, 0
      %p74 = por %p72, %p73
      %s75 = ssub.s32 %s20, %s27
      %p76 = scmp.eq.s32.totalorder %s75, 0
      %s78 = sadd.s32 %s77, 1
      %s79 = scalar_select %p76, %s77, %s78
      %p82 = pneg %p76
      %p83 = scmp.eq.s32.totalorder %s20, 3
      %p84 = por %p82, %p83
      %p85 = scmp.ne.s32.totalorder %s77, %s80
      %p86 = scmp.eq.s32.totalorder %s20, 0
      %p87 = por %p85, %p86
      %p88 = scmp.ne.s32.totalorder %s77, %s80
      %p89 = scmp.eq.s32.totalorder %s25, 3
      %p90 = por %p88, %p89
      %p91 = scmp.ne.s32.totalorder %s80, %s81
      %p92 = scmp.eq.s32.totalorder %s25, 0
      %p93 = por %p91, %p92
      %p94 = scmp.ne.s32.totalorder %s80, %s81
      %p95 = scmp.eq.s32.totalorder %s26, 3
      %p96 = por %p94, %p95
      %p98 = scmp.ne.s32.totalorder %s81, %s97
      %p99 = scmp.eq.s32.totalorder %s26, 0
      %p100 = por %p98, %p99
      %s101 = ssub.s32 %s20, %s27
      %p102 = scmp.eq.s32.totalorder %s101, 0
      %s104 = sadd.s32 %s103, 1
      %s105 = scalar_select %p102, %s103, %s104
      %p108 = pneg %p102
      %p109 = scmp.eq.s32.totalorder %s20, 3
      %p110 = por %p108, %p109
      %p111 = scmp.ne.s32.totalorder %s103, %s106
      %p112 = scmp.eq.s32.totalorder %s20, 0
      %p113 = por %p111, %p112
      %p114 = scmp.ne.s32.totalorder %s103, %s106
      %p115 = scmp.eq.s32.totalorder %s25, 3
      %p116 = por %p114, %p115
      %p117 = scmp.ne.s32.totalorder %s106, %s107
      %p118 = scmp.eq.s32.totalorder %s25, 0
      %p119 = por %p117, %p118
      %p120 = scmp.ne.s32.totalorder %s106, %s107
      %p121 = scmp.eq.s32.totalorder %s26, 3
      %p122 = por %p120, %p121
      %p124 = scmp.ne.s32.totalorder %s107, %s123
      %p125 = scmp.eq.s32.totalorder %s26, 0
      %p126 = por %p124, %p125
      %p127 = scmp.le.s32.totalorder 1, %s20
      %p128 = scmp.lt.s32.totalorder %s20, 5
      %p129 = pnand %p127, %p128
      %p130 = pneg %p129
      // Predicated region
      $region9: #{tpu_custom_call.1} parent=5 // pred_check
        _
      $region10: #{tpu_custom_call.1} parent=5 // pred_check_branch
        %132 = sbr.rel (%p129) target = $region12
      $region11: #{tpu_custom_call.1} parent=5 // pred_region
        %s133 = ssub.s32 %s20, 1
        // Predicated region
        $region13: #{tpu_custom_call.1} parent=11 // pred_check
          %p134 = pneg %p67
        $region14: #{tpu_custom_call.1} parent=11 // pred_check_branch
          %136 = sbr.rel (%p134) target = $region16
        $region15: #{tpu_custom_call.1} parent=11 // pred_region
          %s138 = ssub.s32 1024, 1024
          %139 = vsyncadd [#allocation6], %s138
          %s140 = sshll.u32 [#allocation5], 4
          %s141 = int_to_ptr.vmem [resolvable:$true] %s140
          %146 = dma.hbm_to_vmem [thread:$0]  %s1, 1024, %s141, [#allocation6], 64, 64, 4
        $region16: #{tpu_custom_call.1} parent=11 // pred_fallthru
          _
      $region12: #{tpu_custom_call.1} parent=5 // pred_fallthru
        _
      %p147 = scmp.lt.s32.totalorder %s20, 4
      // Predicated region
      $region17: #{tpu_custom_call.1} parent=5 // pred_check
        %p148 = pneg %p147
      $region18: #{tpu_custom_call.1} parent=5 // pred_check_branch
        %150 = sbr.rel (%p148) target = $region20
      $region19: #{tpu_custom_call.1} parent=5 // pred_region
        // Predicated region
        $region21: #{tpu_custom_call.1} parent=19 // pred_check
          %p151 = pneg %p40
        $region22: #{tpu_custom_call.1} parent=19 // pred_check_branch
          %153 = sbr.rel (%p151) target = $region24
        $region23: #{tpu_custom_call.1} parent=19 // pred_region
          %s154 = sand.u32 %s30, 1
          %s155 = scalar_lea.sflag [#allocation3], %s154
          %s156 = sand.u32 %s30, 1
          %s157 = smul.addr %s156, 64
          %s158 = scalar_lea.vmem [#allocation2], %s157
          %s159 = smul.u32 16, %s20
          %s161 = ssub.s32 1024, 1024
          %162 = vsyncadd %s155, %s161
          %s163 = smul.addr %s159, 64
          %s164 = scalar_lea.hbm %s0, %s163
          %s165 = sshll.u32 %s158, 4
          %s166 = int_to_ptr.vmem [resolvable:$true] %s165
          %171 = dma.hbm_to_vmem [thread:$0]  %s164, 1024, %s166, %s155, 64, 64, 4
        $region24: #{tpu_custom_call.1} parent=19 // pred_fallthru
          _
      $region20: #{tpu_custom_call.1} parent=5 // pred_fallthru
        _
      %p172 = scmp.le.s32.totalorder 1, %s20
      %p173 = scmp.lt.s32.totalorder %s20, 5
      %p174 = pnand %p172, %p173
      %p175 = pneg %p174
      // Predicated region
      $region25: #{tpu_custom_call.1} parent=5 // pred_check
        _
      $region26: #{tpu_custom_call.1} parent=5 // pred_check_branch
        %177 = sbr.rel (%p174) target = $region28
      $region27: #{tpu_custom_call.1} parent=5 // pred_region
        %s178 = ssub.s32 %s20, 1
        %s179 = sand.u32 %s33, 1
        %s180 = scalar_lea.sflag [#allocation3], %s179
        %s181 = sand.u32 %s33, 1
        %s182 = smul.addr %s181, 64
        %s183 = scalar_lea.vmem [#allocation2], %s182
        // Predicated region
        $region29: #{tpu_custom_call.1} parent=27 // pred_check
          %p184 = pneg %p46
        $region30: #{tpu_custom_call.1} parent=27 // pred_check_branch
          %186 = sbr.rel (%p184) target = $region32
        $region31: #{tpu_custom_call.1} parent=27 // pred_region
          %187 = dma.done %s180, 1024
        $region32: #{tpu_custom_call.1} parent=27 // pred_fallthru
          _
        // Predicated region
        $region33: #{tpu_custom_call.1} parent=27 // pred_check
          %p188 = pneg %p67
        $region34: #{tpu_custom_call.1} parent=27 // pred_check_branch
          %190 = sbr.rel (%p188) target = $region36
        $region35: #{tpu_custom_call.1} parent=27 // pred_region
          %191 = dma.done [#allocation6], 1024
        $region36: #{tpu_custom_call.1} parent=27 // pred_fallthru
          _
        %s192 = sand.u32 %s33, 1
        %s193 = scalar_lea.sflag [#allocation3], %s192
        %s194 = sand.u32 %s33, 1
        %s195 = smul.addr %s194, 64
        %s196 = scalar_lea.vmem [#allocation2], %s195
        %p197 = pneg %p46
        %p198 = pneg %p43
        %p199 = pneg %p67
        %p200 = pneg %p64
        %p201 = pneg %p93
        %p202 = pneg %p90
        %s203 = sand.u32 %s80, 1
        %s204 = scalar_lea.sflag [#allocation4], %s203
        %s205 = sand.u32 %s80, 1
        %s206 = smul.addr %s205, 128
        %s207 = scalar_lea.vmem [#allocation7], %s206
        %p208 = pneg %p119
        %p209 = pneg %p116
        %s210 = sand.u32 %s106, 1
        %s211 = scalar_lea.sflag [#allocation9], %s210
        %s212 = sand.u32 %s106, 1
        %s213 = smul.addr %s212, 2
        %s214 = scalar_lea.vmem [#allocation8], %s213
        %s215 = smul.u32 16, %s25
        %s216 = smul.u32 16, %s25
        %v218 = vld [vmem:[%s183] sm:$0xf]
        %v219 = vld [vmem:[%s183 + $0x4] sm:$0xf]
        %v220 = vld [vmem:[%s183 + $0x8] sm:$0xf]
        %v221 = vld [vmem:[%s183 + $0xc] sm:$0xf]
        %v222 = vld [vmem:[%s183 + $0x10] sm:$0xf]
        %v223 = vld [vmem:[%s183 + $0x14] sm:$0xf]
        %v224 = vld [vmem:[%s183 + $0x18] sm:$0xf]
        %v225 = vld [vmem:[%s183 + $0x1c] sm:$0xf]
        %v226 = vld [vmem:[%s183 + $0x20] sm:$0xf]
        %v227 = vld [vmem:[%s183 + $0x24] sm:$0xf]
        %v228 = vld [vmem:[%s183 + $0x28] sm:$0xf]
        %v229 = vld [vmem:[%s183 + $0x2c] sm:$0xf]
        %v230 = vld [vmem:[%s183 + $0x30] sm:$0xf]
        %v231 = vld [vmem:[%s183 + $0x34] sm:$0xf]
        %v232 = vld [vmem:[%s183 + $0x38] sm:$0xf]
        %v233 = vld [vmem:[%s183 + $0x3c] sm:$0xf]
        %v234 = vld [vmem:[#allocation5] sm:$0xf]
        %v235 = vld [vmem:[#allocation5 + $0x4] sm:$0xf]
        %v236 = vld [vmem:[#allocation5 + $0x8] sm:$0xf]
        %v237 = vld [vmem:[#allocation5 + $0xc] sm:$0xf]
        %v238 = vld [vmem:[#allocation5 + $0x10] sm:$0xf]
        %v239 = vld [vmem:[#allocation5 + $0x14] sm:$0xf]
        %v240 = vld [vmem:[#allocation5 + $0x18] sm:$0xf]
        %v241 = vld [vmem:[#allocation5 + $0x1c] sm:$0xf]
        %v242 = vld [vmem:[#allocation5 + $0x20] sm:$0xf]
        %v243 = vld [vmem:[#allocation5 + $0x24] sm:$0xf]
        %v244 = vld [vmem:[#allocation5 + $0x28] sm:$0xf]
        %v245 = vld [vmem:[#allocation5 + $0x2c] sm:$0xf]
        %v246 = vld [vmem:[#allocation5 + $0x30] sm:$0xf]
        %v247 = vld [vmem:[#allocation5 + $0x34] sm:$0xf]
        %v248 = vld [vmem:[#allocation5 + $0x38] sm:$0xf]
        %v249 = vld [vmem:[#allocation5 + $0x3c] sm:$0xf]
        %v266 = vunpack.c.l.b16 %v218
        %v267 = vunpack.c.l.b16 %v219
        %v268 = vunpack.c.l.b16 %v220
        %v269 = vunpack.c.l.b16 %v221
        %v270 = vunpack.c.l.b16 %v222
        %v271 = vunpack.c.l.b16 %v223
        %v272 = vunpack.c.l.b16 %v224
        %v273 = vunpack.c.l.b16 %v225
        %v274 = vunpack.c.l.b16 %v226
        %v275 = vunpack.c.l.b16 %v227
        %v276 = vunpack.c.l.b16 %v228
        %v277 = vunpack.c.l.b16 %v229
        %v278 = vunpack.c.l.b16 %v230
        %v279 = vunpack.c.l.b16 %v231
        %v280 = vunpack.c.l.b16 %v232
        %v281 = vunpack.c.l.b16 %v233
        %v282 = vpack.c.b16 %v267, %v266
        %v283 = vpack.c.b16 %v269, %v268
        %v284 = vpack.c.b16 %v271, %v270
        %v285 = vpack.c.b16 %v273, %v272
        %v286 = vpack.c.b16 %v275, %v274
        %v287 = vpack.c.b16 %v277, %v276
        %v288 = vpack.c.b16 %v279, %v278
        %v289 = vpack.c.b16 %v281, %v280
        %v314 = vunpack.c.l.b16 %v234
        %v315 = vunpack.c.l.b16 %v235
        %v316 = vunpack.c.l.b16 %v236
        %v317 = vunpack.c.l.b16 %v237
        %v318 = vunpack.c.l.b16 %v238
        %v319 = vunpack.c.l.b16 %v239
        %v320 = vunpack.c.l.b16 %v240
        %v321 = vunpack.c.l.b16 %v241
        %v322 = vunpack.c.l.b16 %v242
        %v323 = vunpack.c.l.b16 %v243
        %v324 = vunpack.c.l.b16 %v244
        %v325 = vunpack.c.l.b16 %v245
        %v326 = vunpack.c.l.b16 %v246
        %v327 = vunpack.c.l.b16 %v247
        %v328 = vunpack.c.l.b16 %v248
        %v329 = vunpack.c.l.b16 %v249
        %v330 = vpack.c.b16 %v315, %v314
        %v331 = vpack.c.b16 %v317, %v316
        %v332 = vpack.c.b16 %v319, %v318
        %v333 = vpack.c.b16 %v321, %v320
        %v334 = vpack.c.b16 %v323, %v322
        %v335 = vpack.c.b16 %v325, %v324
        %v336 = vpack.c.b16 %v327, %v326
        %v337 = vpack.c.b16 %v329, %v328
        %346 = vmatprep.subr.bf16.mxu0 0
        %347 = vmatpush1.bf16.msra.mxu0 %v330
        %348 = vmatprep.subr.bf16.mxu0 0
        %349 = vmatpush1.bf16.msra.mxu0 %v331
        %350 = vmatprep.subr.bf16.mxu0 0
        %351 = vmatpush1.bf16.msra.mxu0 %v332
        %352 = vmatprep.subr.bf16.mxu0 0
        %353 = vmatpush1.bf16.msra.mxu0 %v333
        %354 = vmatprep.subr.bf16.mxu0 0
        %355 = vmatpush1.bf16.msra.mxu0 %v334
        %356 = vmatprep.subr.bf16.mxu0 0
        %357 = vmatpush1.bf16.msra.mxu0 %v335
        %358 = vmatprep.subr.bf16.mxu0 0
        %359 = vmatpush1.bf16.msra.mxu0 %v336
        %360 = vmatprep.subr.bf16.mxu0 0
        %361 = vmatpush1.bf16.msra.mxu0 %v337
        %362 = vmatprep.subr.bf16.mxu0 0
        %363 = vmatpush1.bf16.msra.mxu0 0
        %364 = vmatprep.subr.bf16.mxu0 0
        %365 = vmatpush1.bf16.msra.mxu0 0
        %366 = vmatprep.subr.bf16.mxu0 0
        %367 = vmatpush1.bf16.msra.mxu0 0
        %368 = vmatprep.subr.bf16.mxu0 0
        %369 = vmatpush1.bf16.msra.mxu0 0
        %370 = vmatprep.subr.bf16.mxu0 0
        %371 = vmatpush1.bf16.msra.mxu0 0
        %372 = vmatprep.subr.bf16.mxu0 0
        %373 = vmatpush1.bf16.msra.mxu0 0
        %374 = vmatprep.subr.bf16.mxu0 0
        %375 = vmatpush1.bf16.msra.mxu0 0
        %376 = vmatprep.subr.bf16.mxu0 0
        %377 = vmatpush1.bf16.msra.mxu0 0
        %378 = vmatprep.mubr.bf16.mxu0 0
        %379 = vmatmul.mubr.bf16.gmra.mrb[0].mxu0 %v282
        %v380 = vpop.f32.mrb[0].mxu0
        %v381 = vadd.f32 0.0, %v380
        %v382 = vpop.f32.mrb[0].mxu0
        %v383 = vpop.f32.mrb[0].mxu0
        %v384 = vadd.f32 0.0, %v383
        %v385 = vpop.f32.mrb[0].mxu0
        %386 = vmatprep.mubr.bf16.mxu0 0
        %387 = vmatmul.mubr.bf16.gmra.mrb[0].mxu0 %v283
        %v388 = vpop.f32.mrb[0].mxu0
        %v389 = vadd.f32 0.0, %v388
        %v390 = vpop.f32.mrb[0].mxu0
        %v391 = vpop.f32.mrb[0].mxu0
        %v392 = vadd.f32 0.0, %v391
        %v393 = vpop.f32.mrb[0].mxu0
        %394 = vmatprep.mubr.bf16.mxu0 0
        %395 = vmatmul.mubr.bf16.gmra.mrb[0].mxu0 %v284
        %v396 = vpop.f32.mrb[0].mxu0
        %v397 = vadd.f32 0.0, %v396
        %v398 = vpop.f32.mrb[0].mxu0
        %v399 = vpop.f32.mrb[0].mxu0
        %v400 = vadd.f32 0.0, %v399
        %v401 = vpop.f32.mrb[0].mxu0
        %402 = vmatprep.mubr.bf16.mxu0 0
        %403 = vmatmul.mubr.bf16.gmra.mrb[0].mxu0 %v285
        %v404 = vpop.f32.mrb[0].mxu0
        %v405 = vadd.f32 0.0, %v404
        %v406 = vpop.f32.mrb[0].mxu0
        %v407 = vpop.f32.mrb[0].mxu0
        %v408 = vadd.f32 0.0, %v407
        %v409 = vpop.f32.mrb[0].mxu0
        %410 = vmatprep.mubr.bf16.mxu0 0
        %411 = vmatmul.mubr.bf16.gmra.mrb[0].mxu0 %v286
        %v412 = vpop.f32.mrb[0].mxu0
        %v413 = vadd.f32 0.0, %v412
        %v414 = vpop.f32.mrb[0].mxu0
        %v415 = vpop.f32.mrb[0].mxu0
        %v416 = vadd.f32 0.0, %v415
        %v417 = vpop.f32.mrb[0].mxu0
        %418 = vmatprep.mubr.bf16.mxu0 0
        %419 = vmatmul.mubr.bf16.gmra.mrb[0].mxu0 %v287
        %v420 = vpop.f32.mrb[0].mxu0
        %v421 = vadd.f32 0.0, %v420
        %v422 = vpop.f32.mrb[0].mxu0
        %v423 = vpop.f32.mrb[0].mxu0
        %v424 = vadd.f32 0.0, %v423
        %v425 = vpop.f32.mrb[0].mxu0
        %426 = vmatprep.mubr.bf16.mxu0 0
        %427 = vmatmul.mubr.bf16.gmra.mrb[0].mxu0 %v288
        %v428 = vpop.f32.mrb[0].mxu0
        %v429 = vadd.f32 0.0, %v428
        %v430 = vpop.f32.mrb[0].mxu0
        %v431 = vpop.f32.mrb[0].mxu0
        %v432 = vadd.f32 0.0, %v431
        %v433 = vpop.f32.mrb[0].mxu0
        %434 = vmatprep.mubr.bf16.mxu0 0
        %435 = vmatmul.mubr.bf16.gmra.mrb[0].mxu0 %v289
        %v436 = vpop.f32.mrb[0].mxu0
        %v437 = vadd.f32 0.0, %v436
        %v438 = vpop.f32.mrb[0].mxu0
        %v439 = vpop.f32.mrb[0].mxu0
        %v440 = vadd.f32 0.0, %v439
        %v441 = vpop.f32.mrb[0].mxu0
        %442 = vdwg.mxu0
        %443 = vst [vmem:[%s207] sm:$0xff] %v381
        %444 = vst [vmem:[%s207 + $0x8] sm:$0xff] %v384
        %445 = vst [vmem:[%s207 + $0x10] sm:$0xff] %v389
        %446 = vst [vmem:[%s207 + $0x18] sm:$0xff] %v392
        %447 = vst [vmem:[%s207 + $0x20] sm:$0xff] %v397
        %448 = vst [vmem:[%s207 + $0x28] sm:$0xff] %v400
        %449 = vst [vmem:[%s207 + $0x30] sm:$0xff] %v405
        %450 = vst [vmem:[%s207 + $0x38] sm:$0xff] %v408
        %451 = vst [vmem:[%s207 + $0x40] sm:$0xff] %v413
        %452 = vst [vmem:[%s207 + $0x48] sm:$0xff] %v416
        %453 = vst [vmem:[%s207 + $0x50] sm:$0xff] %v421
        %454 = vst [vmem:[%s207 + $0x58] sm:$0xff] %v424
        %455 = vst [vmem:[%s207 + $0x60] sm:$0xff] %v429
        %456 = vst [vmem:[%s207 + $0x68] sm:$0xff] %v432
        %457 = vst [vmem:[%s207 + $0x70] sm:$0xff] %v437
        %458 = vst [vmem:[%s207 + $0x78] sm:$0xff] %v440
        %v459 = vadd.f32 %v381, %v384
        %v460 = vadd.f32 %v459, %v389
        %v461 = vadd.f32 %v460, %v392
        %v462 = vadd.f32 %v461, %v397
        %v463 = vadd.f32 %v462, %v400
        %v464 = vadd.f32 %v463, %v405
        %v465 = vadd.f32 %v464, %v408
        %v466 = vadd.f32 %v465, %v413
        %v467 = vadd.f32 %v466, %v416
        %v468 = vadd.f32 %v467, %v421
        %v469 = vadd.f32 %v468, %v424
        %v470 = vadd.f32 %v469, %v429
        %v471 = vadd.f32 %v470, %v432
        %v472 = vadd.f32 %v471, %v437
        %v473 = vadd.f32 %v472, %v440
        %v474 = vrot.slane %v473, 4
        %v475 = vadd.f32 %v473, %v474
        %v476 = vrot.slane %v475, 2
        %v477 = vadd.f32 %v475, %v476
        %v478 = vrot.slane %v477, 1
        %v479 = vadd.f32 %v477, %v478
        %v480 = vmul.f32 %v381, %v381
        %v481 = vmul.f32 %v384, %v384
        %v482 = vmul.f32 %v389, %v389
        %v483 = vmul.f32 %v392, %v392
        %v484 = vmul.f32 %v397, %v397
        %v485 = vmul.f32 %v400, %v400
        %v486 = vmul.f32 %v405, %v405
        %v487 = vmul.f32 %v408, %v408
        %v488 = vmul.f32 %v413, %v413
        %v489 = vmul.f32 %v416, %v416
        %v490 = vmul.f32 %v421, %v421
        %v491 = vmul.f32 %v424, %v424
        %v492 = vmul.f32 %v429, %v429
        %v493 = vmul.f32 %v432, %v432
        %v494 = vmul.f32 %v437, %v437
        %v495 = vmul.f32 %v440, %v440
        %v496 = vadd.f32 %v480, %v481
        %v497 = vadd.f32 %v496, %v482
        %v498 = vadd.f32 %v497, %v483
        %v499 = vadd.f32 %v498, %v484
        %v500 = vadd.f32 %v499, %v485
        %v501 = vadd.f32 %v500, %v486
        %v502 = vadd.f32 %v501, %v487
        %v503 = vadd.f32 %v502, %v488
        %v504 = vadd.f32 %v503, %v489
        %v505 = vadd.f32 %v504, %v490
        %v506 = vadd.f32 %v505, %v491
        %v507 = vadd.f32 %v506, %v492
        %v508 = vadd.f32 %v507, %v493
        %v509 = vadd.f32 %v508, %v494
        %v510 = vadd.f32 %v509, %v495
        %v511 = vrot.slane %v510, 4
        %v512 = vadd.f32 %v510, %v511
        %v513 = vrot.slane %v512, 2
        %v514 = vadd.f32 %v512, %v513
        %v515 = vrot.slane %v514, 1
        %v516 = vadd.f32 %v514, %v515
        %vm517 = vcmask 1040384
        %v518 = vsel %vm517, %v479, %v516
        %519 = vst [vmem:[%s214] sm:$0x3] %v518
        %s520 = sand.u32 %s80, 1
        %s521 = scalar_lea.sflag [#allocation4], %s520
        %s522 = sand.u32 %s80, 1
        %s523 = smul.addr %s522, 128
        %s524 = scalar_lea.vmem [#allocation7], %s523
        %s525 = sand.u32 %s106, 1
        %s526 = scalar_lea.sflag [#allocation9], %s525
        %s527 = sand.u32 %s106, 1
        %s528 = smul.addr %s527, 2
        %s529 = scalar_lea.vmem [#allocation8], %s528
        // Predicated region
        $region37: #{tpu_custom_call.1} parent=27 // pred_check
          %p530 = pneg %p90
        $region38: #{tpu_custom_call.1} parent=27 // pred_check_branch
          %532 = sbr.rel (%p530) target = $region40
        $region39: #{tpu_custom_call.1} parent=27 // pred_region
          %s533 = smul.u32 16, %s25
          %s535 = ssub.s32 2048, 2048
          %536 = vsyncadd %s521, %s535
          %s537 = smul.addr %s533, 128
          %s538 = scalar_lea.hbm %s2, %s537
          %s539 = sshll.u32 %s524, 4
          %s540 = int_to_ptr.vmem [resolvable:$true] %s539
          %545 = dma.vmem_to_hbm [thread:$0]  %s540, 2048, %s538, %s521, 128, 128, 8
        $region40: #{tpu_custom_call.1} parent=27 // pred_fallthru
          _
        // Predicated region
        $region41: #{tpu_custom_call.1} parent=27 // pred_check
          %p546 = pneg %p116
        $region42: #{tpu_custom_call.1} parent=27 // pred_check_branch
          %548 = sbr.rel (%p546) target = $region44
        $region43: #{tpu_custom_call.1} parent=27 // pred_region
          %s550 = ssub.s32 32, 32
          %551 = vsyncadd %s526, %s550
          %s552 = smul.addr %s25, 32
          %s553 = scalar_lea.hbm %s3, %s552
          %s555 = sshll.u32 %s529, 4
          %s556 = int_to_ptr.vmem [resolvable:$true] %s555
          %558 = dma.vmem_to_hbm [thread:$0]  %s556, 32, %s553, %s526
        $region44: #{tpu_custom_call.1} parent=27 // pred_fallthru
          _
      $region28: #{tpu_custom_call.1} parent=5 // pred_fallthru
        _
      %p559 = scmp.le.s32.totalorder 2, %s20
      // Predicated region
      $region45: #{tpu_custom_call.1} parent=5 // pred_check
        %p560 = pneg %p559
      $region46: #{tpu_custom_call.1} parent=5 // pred_check_branch
        %562 = sbr.rel (%p560) target = $region48
      $region47: #{tpu_custom_call.1} parent=5 // pred_region
        %s563 = ssub.s32 %s20, 2
        // Predicated region
        $region49: #{tpu_custom_call.1} parent=47 // pred_check
          %p564 = pneg %p96
        $region50: #{tpu_custom_call.1} parent=47 // pred_check_branch
          %566 = sbr.rel (%p564) target = $region52
        $region51: #{tpu_custom_call.1} parent=47 // pred_region
          %s567 = sand.u32 %s81, 1
          %s568 = scalar_lea.sflag [#allocation4], %s567
          %s569 = sand.u32 %s81, 1
          %s570 = smul.addr %s569, 128
          %s571 = scalar_lea.vmem [#allocation7], %s570
          %572 = dma.done %s568, 2048
        $region52: #{tpu_custom_call.1} parent=47 // pred_fallthru
          _
        // Predicated region
        $region53: #{tpu_custom_call.1} parent=47 // pred_check
          %p573 = pneg %p122
        $region54: #{tpu_custom_call.1} parent=47 // pred_check_branch
          %575 = sbr.rel (%p573) target = $region56
        $region55: #{tpu_custom_call.1} parent=47 // pred_region
          %s576 = sand.u32 %s107, 1
          %s577 = scalar_lea.sflag [#allocation9], %s576
          %s578 = sand.u32 %s107, 1
          %s579 = smul.addr %s578, 2
          %s580 = scalar_lea.vmem [#allocation8], %s579
          %581 = dma.done %s577, 32
        $region56: #{tpu_custom_call.1} parent=47 // pred_fallthru
          _
      $region48: #{tpu_custom_call.1} parent=5 // pred_fallthru
        _
    $region6: #{tpu_custom_call.1} parent=1 // loop_footer
      %s24 = sadd.s32 1, %s20
    $region7: #{tpu_custom_call.1} parent=1 // loop_footer_branch
      %19 = sbr.rel target = $region3
    $region8: #{tpu_custom_call.1} parent=1 // loop_exit
      _
    %582 = vsyncpa [#allocation3], 1
    %s583 = scalar_lea.sflag [#allocation3], 1
    %584 = vsyncpa %s583, 1
    %585 = vsyncpa [#allocation6], 1
    %586 = vsyncpa [#allocation4], 1
    %s587 = scalar_lea.sflag [#allocation4], 1
    %588 = vsyncpa %s587, 1
    %589 = vsyncpa [#allocation9], 1
    %s590 = scalar_lea.sflag [#allocation9], 1
    %591 = vsyncpa %s590, 1

</llo_original>
